<compile_context>
chip_gen: v6e
topology: v6e:2x2x1
jax: 0.10.0
libtpu: 0.0.40
codegen_flags: <defaults>
</compile_context>

<pallas_src>
import jax
import jax.numpy as jnp
from jax.experimental import pallas as pl
from jax.experimental.pallas import tpu as pltpu

_MIB = 1024 * 1024


def _tpu_vmem_capacity_and_is_v7():
    """Best-effort query of per-core VMEM capacity and v7x detection."""
    cap = None
    try:
        info = pltpu.get_tpu_info()
        cap = int(getattr(info, "vmem_capacity_bytes"))
    except Exception:
        cap = None
    kind = ""
    try:
        kind = jax.devices()[0].device_kind.lower()
    except Exception:
        pass
    is_v7 = "v7" in kind
    if cap is None or cap <= 0:
        # v5e/v6e: 128 MiB physical; v7x: 64 MiB per TensorCore; unknown: be safe.
        cap = 64 * _MIB if (is_v7 or not kind) else 128 * _MIB
    return cap, is_v7


def _make_kernel(*, rows, tr, use_tw, remove_anns, needs_row_mask):
    """Build the kernel body, specialized on the module flags.

    Blocks per grid step (i over row tiles, j over HW tiles):
      o/k/p/t : (tr, hw_t)  heatmaps (output, keypoints, parts, target)
      w       : (tr, 1) or (tr, 2)  [w] or [w, w*vis]   (only if use_tw)
      out     : (1, 1, hw_t) f32 per-tile partial sums (lane-dense).
    """

    def body(o_ref, k_ref, p_ref, t_ref, *rest):
        if use_tw:
            w_ref, out_ref = rest
        else:
            (out_ref,) = rest

        o = o_ref[...].astype(jnp.float32)
        t = t_ref[...].astype(jnp.float32)
        k = k_ref[...].astype(jnp.float32)
        p = p_ref[...].astype(jnp.float32)

        dt = o - t            # simple_loss:   MSE(output*w,  target*w)
        dk = k - o            # keypoint_loss: MSE(kp*w,      output*w)
        dp = p - o            # parts_loss:    MSE(parts*w*v, output*w*v)

        e = dt * dt + dk * dk   # scaled by w^2
        f = dp * dp             # scaled by (w*vis)^2

        if use_tw:
            if remove_anns:
                w = w_ref[:, 0:1].astype(jnp.float32)    # (tr, 1)
                wv = w_ref[:, 1:2].astype(jnp.float32)   # (tr, 1)
                d = e * (w * w) + f * (wv * wv)
            else:
                w = w_ref[...].astype(jnp.float32)       # (tr, 1)
                d = (e + f) * (w * w)
        else:
            # PyTorch skips both the weight and the visibility mask here.
            d = e + f

        if needs_row_mask:
            # Ragged last row tile: edge blocks may contain stale VMEM, so
            # select-away invalid rows before summing (select, not multiply,
            # so inf/NaN garbage cannot leak through).
            i = pl.program_id(0)
            valid = jnp.minimum(rows - i * tr, tr)
            row_ids = jax.lax.broadcasted_iota(jnp.int32, d.shape, 0)
            d = jnp.where(row_ids < valid, d, 0.0)

        # Sublane reduce only; cross-lane reduce deferred to the wrapper.
        out_ref[0] = jnp.sum(d, axis=0, keepdims=True)   # (1, hw_t)

    return body


def contrastive_join_mse_loss(output, output_keypoints, output_parts,
                              target, target_weight, parts_joints_vis,
                              use_target_weight=True, remove_anns=False,
                              row_tile=None):
    B, J, H, W = output.shape
    HW = H * W
    rows = B * J

    # Contiguous reshape only -- no transpose, no padding, no extra HBM pass.
    def flat(x):
        return x.reshape(rows, HW)

    o = flat(output)
    k = flat(output_keypoints)
    p = flat(output_parts)
    t = flat(target)

    inputs = [o, k, p, t]
    wcols = 0
    if use_target_weight:
        w = target_weight.reshape(rows, 1).astype(jnp.float32)
        if remove_anns:
            v = parts_joints_vis[:, :, 0:1].reshape(rows, 1).astype(jnp.float32)
            wmat = jnp.concatenate([w, w * v], axis=1)   # (rows, 2): [w, w*vis]
            wcols = 2
        else:
            wmat = w                                     # (rows, 1)
            wcols = 1
        inputs.append(wmat)

    # --- generation-aware tile selection ------------------------------------
    cap, is_v7 = _tpu_vmem_capacity_and_is_v7()
    vmem_limit = min(max(cap - 8 * _MIB, cap // 2), 100 * _MIB)
    # Streamed tiles + in-body f32 temporaries must fit; keep headroom.
    budget = int(vmem_limit * 0.6)

    isz = jnp.dtype(output.dtype).itemsize
    # 4 heatmap streams, double-buffered, + ~4 f32-sized compute temporaries.
    per_elem = 2 * 4 * isz + 4 * 4

    hw_t = HW
    tr = (budget // (per_elem * HW)) // 8 * 8
    if tr < 8:
        # A row tile of 8 with full HW exceeds the budget: tile HW instead.
        if HW % 128 == 0:
            max_hw = max(128, (budget // (per_elem * 8)) // 128 * 128)
            hw_t = 128
            cand = 256
            while cand <= max_hw:
                if HW % cand == 0:
                    hw_t = cand
                cand += 128
        # TODO(synk): huge heatmaps whose HW is not a multiple of 128 keep
        # hw_t=HW and may exceed the budget; unreachable for standard sizes.
        tr = 8

    tr = min(tr, -(-rows // 8) * 8)
    if is_v7:
        # Keep >= ~8 row tiles so megacore sharding balances both TensorCores.
        tr_cap = max(8, (((rows + 7) // 8) + 7) // 8 * 8)
        tr = min(tr, tr_cap)
    tr = max(tr, 8)
    if tr >= rows:
        tr = rows            # full-dim block: no ragged edge, no masking
    if row_tile is not None:
        tr = int(row_tile)   # test/tuning override (multiple of 8, or == rows)

    nr = -(-rows // tr)
    nhw = HW // hw_t
    needs_row_mask = (rows % tr) != 0

    kernel = _make_kernel(rows=rows, tr=tr, use_tw=use_target_weight,
                          remove_anns=remove_anns, needs_row_mask=needs_row_mask)

    hm_spec = pl.BlockSpec((tr, hw_t), lambda i, j: (i, j))
    in_specs = [hm_spec, hm_spec, hm_spec, hm_spec]
    if use_target_weight:
        in_specs.append(pl.BlockSpec((tr, wcols), lambda i, j: (i, 0)))
    out_spec = pl.BlockSpec((1, 1, hw_t), lambda i, j: (i, j, 0))

    bytes_accessed = int(4 * rows * HW * isz + rows * wcols * 4
                         + nr * nhw * hw_t * 4)
    cost = pl.CostEstimate(flops=int(11 * rows * HW),
                           transcendentals=0,
                           bytes_accessed=bytes_accessed)

    partial = pl.pallas_call(
        kernel,
        out_shape=jax.ShapeDtypeStruct((nr, nhw, hw_t), jnp.float32),
        grid_spec=pltpu.PrefetchScalarGridSpec(
            num_scalar_prefetch=0,
            grid=(nr, nhw),
            in_specs=in_specs,
            out_specs=out_spec,
        ),
        compiler_params=pltpu.CompilerParams(
            dimension_semantics=("parallel", "parallel"),
            vmem_limit_bytes=int(vmem_limit)),
        cost_estimate=cost,
    )(*inputs)

    # Final cross-lane reduce + uniform scale 0.5 / (B * HW) / J.
    scale = jnp.float32(0.5) / jnp.float32(B * HW * J)
    return jnp.sum(partial) * scale


def _reference_loss(output, output_keypoints, output_parts,
                    target, target_weight, parts_joints_vis,
                    use_target_weight=True, remove_anns=False):
    """Pure-JAX re-implementation of the PyTorch module for validation."""
    B, J = output.shape[:2]

    def single(out, tgt):
        loss = 0.0
        for idx in range(J):
            pred = out[:, idx].reshape(B, -1)
            gt = tgt[:, idx].reshape(B, -1)
            if use_target_weight:
                wj = target_weight[:, idx]
                loss += 0.5 * jnp.mean(((pred * wj) - (gt * wj)) ** 2)
            else:
                loss += 0.5 * jnp.mean((pred - gt) ** 2)
        return loss / J

    def parts(out, tgt):
        loss = 0.0
        for idx in range(J):
            pred = out[:, idx].reshape(B, -1)
            gt = tgt[:, idx].reshape(B, -1)
            vis = (parts_joints_vis[:, idx, 0:1] if remove_anns
                   else jnp.ones((B, 1), jnp.float32))
            if use_target_weight:
                wj = target_weight[:, idx]
                loss += 0.5 * jnp.mean(((pred * wj * vis) - (gt * wj * vis)) ** 2)
            else:
                loss += 0.5 * jnp.mean((pred - gt) ** 2)
        return loss / J

    simple_loss = single(output, target)
    keypoint_loss = single(output_keypoints, output)
    parts_loss = parts(output_parts, output)
    return simple_loss + keypoint_loss + parts_loss


if __name__ == "__main__":
    # Heatmaps (B, J, H, W), target_weight (B, J, 1), parts_joints_vis (B, J, 3).
    # Second config forces a ragged multi-tile grid (row_tile=8, rows=12) so the
    # in-kernel row-validity mask path is exercised on every TPU generation.
    key = jax.random.PRNGKey(0)
    configs = [
        dict(B=2, J=4, H=16, W=16, row_tile=None),
        dict(B=3, J=4, H=16, W=16, row_tile=8),
    ]

    ok = True
    for cfg in configs:
        B, J, H, W = cfg["B"], cfg["J"], cfg["H"], cfg["W"]
        key, k1, k2, k3, k4, k5, k6 = jax.random.split(key, 7)
        output = jax.random.normal(k1, (B, J, H, W), dtype=jnp.float32)
        output_keypoints = jax.random.normal(k2, (B, J, H, W), dtype=jnp.float32)
        output_parts = jax.random.normal(k3, (B, J, H, W), dtype=jnp.float32)
        target = jax.random.normal(k4, (B, J, H, W), dtype=jnp.float32)
        target_weight = jax.random.uniform(k5, (B, J, 1), dtype=jnp.float32)
        parts_joints_vis = (jax.random.uniform(k6, (B, J, 3)) > 0.5).astype(jnp.float32)

        for use_tw, rm in [(True, False), (True, True), (False, False)]:
            loss = contrastive_join_mse_loss(
                output, output_keypoints, output_parts,
                target, target_weight, parts_joints_vis,
                use_target_weight=use_tw, remove_anns=rm,
                row_tile=cfg["row_tile"])
            loss = jax.block_until_ready(loss)
            ref = _reference_loss(
                output, output_keypoints, output_parts,
                target, target_weight, parts_joints_vis,
                use_target_weight=use_tw, remove_anns=rm)
            good = bool(jnp.allclose(loss, ref, rtol=1e-5, atol=1e-6))
            ok = ok and good
            assert good, (cfg, use_tw, rm, float(loss), float(ref))

    if ok:
        print("KERNEL_OK")
</pallas_src>

<mosaic_0001>
module attributes {stable_mosaic.version = 11 : i64} {
  func.func @body(%arg0: i32, %arg1: i32, %arg2: memref<8x256xf32, #tpu.memory_space<vmem>>, %arg3: memref<8x256xf32, #tpu.memory_space<vmem>>, %arg4: memref<8x256xf32, #tpu.memory_space<vmem>>, %arg5: memref<8x256xf32, #tpu.memory_space<vmem>>, %arg6: memref<8x1xf32, #tpu.memory_space<vmem>>, %arg7: memref<1x1x256xf32, #tpu.memory_space<vmem>>) attributes {dimension_semantics = [#tpu.dimension_semantics<parallel>, #tpu.dimension_semantics<parallel>], iteration_bounds = array<i64: 1, 1>, scalar_prefetch = 0 : i64, scratch_operands = 0 : i64, tpu.core_type = #tpu.core_type<tc>, window_params = [{transform_indices = @transform_0, window_bounds = array<i64: 8, 256>}, {transform_indices = @transform_1, window_bounds = array<i64: 8, 256>}, {transform_indices = @transform_2, window_bounds = array<i64: 8, 256>}, {transform_indices = @transform_3, window_bounds = array<i64: 8, 256>}, {transform_indices = @transform_4, window_bounds = array<i64: 8, 1>}, {transform_indices = @transform_5, window_bounds = array<i64: 1, 1, 256>}]} {
    %c0 = arith.constant 0 : index
    %c0_0 = arith.constant 0 : index
    %0 = vector.load %arg2[%c0, %c0_0] : memref<8x256xf32, #tpu.memory_space<vmem>>, vector<8x256xf32>
    %c0_1 = arith.constant 0 : index
    %c0_2 = arith.constant 0 : index
    %1 = vector.load %arg5[%c0_1, %c0_2] : memref<8x256xf32, #tpu.memory_space<vmem>>, vector<8x256xf32>
    %c0_3 = arith.constant 0 : index
    %c0_4 = arith.constant 0 : index
    %2 = vector.load %arg3[%c0_3, %c0_4] : memref<8x256xf32, #tpu.memory_space<vmem>>, vector<8x256xf32>
    %c0_5 = arith.constant 0 : index
    %c0_6 = arith.constant 0 : index
    %3 = vector.load %arg4[%c0_5, %c0_6] : memref<8x256xf32, #tpu.memory_space<vmem>>, vector<8x256xf32>
    %4 = arith.subf %0, %1 : vector<8x256xf32>
    %5 = arith.subf %2, %0 : vector<8x256xf32>
    %6 = arith.subf %3, %0 : vector<8x256xf32>
    %7 = arith.mulf %4, %4 : vector<8x256xf32>
    %8 = arith.mulf %5, %5 : vector<8x256xf32>
    %9 = arith.addf %7, %8 : vector<8x256xf32>
    %10 = arith.mulf %6, %6 : vector<8x256xf32>
    %c0_7 = arith.constant 0 : index
    %c0_8 = arith.constant 0 : index
    %11 = vector.load %arg6[%c0_7, %c0_8] : memref<8x1xf32, #tpu.memory_space<vmem>>, vector<8x1xf32>
    %12 = arith.addf %9, %10 : vector<8x256xf32>
    %13 = arith.mulf %11, %11 : vector<8x1xf32>
    %14 = vector.broadcast %13 : vector<8x1xf32> to vector<8x256xf32>
    %15 = arith.mulf %12, %14 : vector<8x256xf32>
    %cst = arith.constant dense<0.000000e+00> : vector<256xf32>
    %16 = vector.multi_reduction <add>, %15, %cst [0] : vector<8x256xf32> to vector<256xf32>
    %17 = vector.shape_cast %16 : vector<256xf32> to vector<1x256xf32>
    %c0_9 = arith.constant 0 : index
    %c0_10 = arith.constant 0 : index
    %c0_11 = arith.constant 0 : index
    %18 = vector.load %arg7[%c0_9, %c0_10, %c0_11] : memref<1x1x256xf32, #tpu.memory_space<vmem>>, vector<1x1x256xf32>
    %19 = vector.shape_cast %18 : vector<1x1x256xf32> to vector<1x256xf32>
    %20 = vector.shape_cast %17 : vector<1x256xf32> to vector<1x1x256xf32>
    tpu.vector_store %arg7[%c0_9, %c0_10, %c0_11], %20 {strides = array<i32>} : memref<1x1x256xf32, #tpu.memory_space<vmem>>, vector<1x1x256xf32>,
    return
  }
  func.func @transform_0(%arg0: i32, %arg1: i32) -> (i32, i32) {
    %c0_i32 = arith.constant 0 : i32
    return %arg0, %arg1 : i32, i32
  }
  func.func @transform_1(%arg0: i32, %arg1: i32) -> (i32, i32) {
    %c0_i32 = arith.constant 0 : i32
    return %arg0, %arg1 : i32, i32
  }
  func.func @transform_2(%arg0: i32, %arg1: i32) -> (i32, i32) {
    %c0_i32 = arith.constant 0 : i32
    return %arg0, %arg1 : i32, i32
  }
  func.func @transform_3(%arg0: i32, %arg1: i32) -> (i32, i32) {
    %c0_i32 = arith.constant 0 : i32
    return %arg0, %arg1 : i32, i32
  }
  func.func @transform_4(%arg0: i32, %arg1: i32) -> (i32, i32) {
    %c0_i32 = arith.constant 0 : i32
    %c0_i32_0 = arith.constant 0 : i32
    return %arg0, %c0_i32 : i32, i32
  }
  func.func @transform_5(%arg0: i32, %arg1: i32) -> (i32, i32, i32) {
    %c0_i32 = arith.constant 0 : i32
    %c0_i32_0 = arith.constant 0 : i32
    return %arg0, %arg1, %c0_i32 : i32, i32, i32
  }
}

</mosaic_0001>

<llo_original>
// kernel: tpu_custom_call.1
$region0: #{tpu_custom_call.1}
  #allocation0 [shape = 'u32[]', space=smem, size = 0x4, offset = 0x4, fixed_abs, tag = 'smem constant byte address 0x4 - core index']
  #allocation1 [shape = 'u32[144,128]{1,0:T(1,128)}', space=vmem, size = 0x12000, scoped, tag = 'internal scratch']
  %s0 = inlined_call_operand.hbm [shape: f32[8,256], index: 0, kind: input, shape index: {}]
  %s1 = inlined_call_operand.hbm [shape: f32[8,256], index: 1, kind: input, shape index: {}]
  %s2 = inlined_call_operand.hbm [shape: f32[8,256], index: 2, kind: input, shape index: {}]
  %s3 = inlined_call_operand.hbm [shape: f32[8,256], index: 3, kind: input, shape index: {}]
  %s4 = inlined_call_operand.vmem [shape: f32[8,1], index: 4, kind: input, shape index: {}]
  %s5 = inlined_call_operand.hbm [shape: f32[1,1,256], index: 5, kind: output, shape index: {}]
  %s6 = sld [smem:[#allocation0]]
  $region46: #{tpu_custom_call.1} parent=0
    _
  %s8 = ssub.s32 1, %s6
  %s9 = scalar_select 0, %s8, %s6
  $region1: #{tpu_custom_call.1} parent=0
    #allocation2 [shape = 'u8[8192]{0}', space=vmem, size = 0x2000, scoped, tag = 'input window, operand 0, single buffered']
    #allocation3 [shape = 's32[1]{0}', space=sflag, size = 0x4, scoped, tag = 'scoped memory for tpu_custom_call.1']
    #allocation4 [shape = 's32[1]{0}', space=sflag, size = 0x4, scoped, tag = 'scoped memory for tpu_custom_call.1']
    #allocation5 [shape = 'u8[8192]{0}', space=vmem, size = 0x2000, scoped, tag = 'input window, operand 1, single buffered']
    #allocation6 [shape = 's32[1]{0}', space=sflag, size = 0x4, scoped, tag = 'scoped memory for tpu_custom_call.1']
    #allocation7 [shape = 'u8[8192]{0}', space=vmem, size = 0x2000, scoped, tag = 'input window, operand 2, single buffered']
    #allocation8 [shape = 'u8[8192]{0}', space=vmem, size = 0x2000, scoped, tag = 'input window, operand 3, single buffered']
    #allocation9 [shape = 's32[1]{0}', space=sflag, size = 0x4, scoped, tag = 'scoped memory for tpu_custom_call.1']
    #allocation10 [shape = 'u8[1024]{0}', space=vmem, size = 0x400, scoped, tag = 'output window, operand 0, single buffered']
    %10 = vsyncpa [#allocation3], 0
    %11 = vsyncpa [#allocation6], 0
    %12 = vsyncpa [#allocation9], 0
    %13 = vsyncpa [#allocation4], 0
    // Predicated region
    $region2: #{tpu_custom_call.1} parent=1 // pred_check
      _
    $region3: #{tpu_custom_call.1} parent=1 // pred_check_branch
      %15 = sbr.rel (0) target = $region5
    $region4: #{tpu_custom_call.1} parent=1 // pred_region
      %s17 = ssub.s32 256, 256
      %18 = vsyncadd [#allocation3], %s17
      %s20 = sshll.u32 [#allocation2], 4
      %s21 = int_to_ptr.vmem [resolvable:$true] %s20
      %23 = dma.hbm_to_vmem [thread:$0]  %s0, 256, %s21, [#allocation3]
    $region5: #{tpu_custom_call.1} parent=1 // pred_fallthru
      _
    // Predicated region
    $region6: #{tpu_custom_call.1} parent=1 // pred_check
      _
    $region7: #{tpu_custom_call.1} parent=1 // pred_check_branch
      %25 = sbr.rel (0) target = $region9
    $region8: #{tpu_custom_call.1} parent=1 // pred_region
      %s27 = ssub.s32 256, 256
      %28 = vsyncadd [#allocation6], %s27
      %s30 = sshll.u32 [#allocation5], 4
      %s31 = int_to_ptr.vmem [resolvable:$true] %s30
      %33 = dma.hbm_to_vmem [thread:$0]  %s1, 256, %s31, [#allocation6]
    $region9: #{tpu_custom_call.1} parent=1 // pred_fallthru
      _
    // Predicated region
    $region10: #{tpu_custom_call.1} parent=1 // pred_check
      _
    $region11: #{tpu_custom_call.1} parent=1 // pred_check_branch
      %35 = sbr.rel (0) target = $region13
    $region12: #{tpu_custom_call.1} parent=1 // pred_region
      %s37 = ssub.s32 256, 256
      %38 = vsyncadd [#allocation6], %s37
      %s40 = sshll.u32 [#allocation7], 4
      %s41 = int_to_ptr.vmem [resolvable:$true] %s40
      %43 = dma.hbm_to_vmem [thread:$0]  %s2, 256, %s41, [#allocation6]
    $region13: #{tpu_custom_call.1} parent=1 // pred_fallthru
      _
    // Predicated region
    $region14: #{tpu_custom_call.1} parent=1 // pred_check
      _
    $region15: #{tpu_custom_call.1} parent=1 // pred_check_branch
      %45 = sbr.rel (0) target = $region17
    $region16: #{tpu_custom_call.1} parent=1 // pred_region
      %s47 = ssub.s32 256, 256
      %48 = vsyncadd [#allocation9], %s47
      %s50 = sshll.u32 [#allocation8], 4
      %s51 = int_to_ptr.vmem [resolvable:$true] %s50
      %53 = dma.hbm_to_vmem [thread:$0]  %s3, 256, %s51, [#allocation9]
    $region17: #{tpu_custom_call.1} parent=1 // pred_fallthru
      _
    // Predicated region
    $region18: #{tpu_custom_call.1} parent=1 // pred_check
      _
    $region19: #{tpu_custom_call.1} parent=1 // pred_check_branch
      %55 = sbr.rel (0) target = $region21
    $region20: #{tpu_custom_call.1} parent=1 // pred_region
      _
    $region21: #{tpu_custom_call.1} parent=1 // pred_fallthru
      _
    // Predicated region
    $region22: #{tpu_custom_call.1} parent=1 // pred_check
      _
    $region23: #{tpu_custom_call.1} parent=1 // pred_check_branch
      %57 = sbr.rel (0) target = $region25
    $region24: #{tpu_custom_call.1} parent=1 // pred_region
      %58 = dma.done [#allocation3], 256
    $region25: #{tpu_custom_call.1} parent=1 // pred_fallthru
      _
    // Predicated region
    $region26: #{tpu_custom_call.1} parent=1 // pred_check
      _
    $region27: #{tpu_custom_call.1} parent=1 // pred_check_branch
      %60 = sbr.rel (0) target = $region29
    $region28: #{tpu_custom_call.1} parent=1 // pred_region
      %61 = dma.done [#allocation6], 256
    $region29: #{tpu_custom_call.1} parent=1 // pred_fallthru
      _
    // Predicated region
    $region30: #{tpu_custom_call.1} parent=1 // pred_check
      _
    $region31: #{tpu_custom_call.1} parent=1 // pred_check_branch
      %63 = sbr.rel (0) target = $region33
    $region32: #{tpu_custom_call.1} parent=1 // pred_region
      %64 = dma.done [#allocation6], 256
    $region33: #{tpu_custom_call.1} parent=1 // pred_fallthru
      _
    // Predicated region
    $region34: #{tpu_custom_call.1} parent=1 // pred_check
      _
    $region35: #{tpu_custom_call.1} parent=1 // pred_check_branch
      %66 = sbr.rel (0) target = $region37
    $region36: #{tpu_custom_call.1} parent=1 // pred_region
      %67 = dma.done [#allocation9], 256
    $region37: #{tpu_custom_call.1} parent=1 // pred_fallthru
      _
    %v68 = vld [vmem:[#allocation2] sm:$0xff]
    %v69 = vld [vmem:[#allocation2 + $0x8] sm:$0xff]
    %v70 = vld [vmem:[#allocation8] sm:$0xff]
    %v71 = vld [vmem:[#allocation8 + $0x8] sm:$0xff]
    %v72 = vld [vmem:[#allocation5] sm:$0xff]
    %v73 = vld [vmem:[#allocation5 + $0x8] sm:$0xff]
    %v74 = vld [vmem:[#allocation7] sm:$0xff]
    %v75 = vld [vmem:[#allocation7 + $0x8] sm:$0xff]
    %v76 = vsub.f32 %v68, %v70
    %v77 = vsub.f32 %v69, %v71
    %v78 = vsub.f32 %v72, %v68
    %v79 = vsub.f32 %v73, %v69
    %v80 = vsub.f32 %v74, %v68
    %v81 = vsub.f32 %v75, %v69
    %v82 = vmul.f32 %v76, %v76
    %v83 = vmul.f32 %v77, %v77
    %v84 = vmul.f32 %v78, %v78
    %v85 = vmul.f32 %v79, %v79
    %v86 = vadd.f32 %v82, %v84
    %v87 = vadd.f32 %v83, %v85
    %v88 = vmul.f32 %v80, %v80
    %v89 = vmul.f32 %v81, %v81
    %v90 = vld [vmem:[%s4] sm:$0xff]
    %v91 = vadd.f32 %v86, %v88
    %v92 = vadd.f32 %v87, %v89
    %v93 = vmul.f32 %v90, %v90
    %95 = vset.pattern.permute.xlu0 0
    %96 = vperm.xlu0 %95, %v93
    %v97 = vpop.permute.xlu0 %96
    %v99 = vmul.f32 %v91, %v97
    %v100 = vmul.f32 %v92, %v97
    %v101 = vrot.slane %v99, 4
    %v102 = vadd.f32 %v99, %v101
    %v103 = vrot.slane %v102, 2
    %v104 = vadd.f32 %v102, %v103
    %v105 = vrot.slane %v104, 1
    %v106 = vadd.f32 %v104, %v105
    %v107 = vrot.slane %v100, 4
    %v108 = vadd.f32 %v100, %v107
    %v109 = vrot.slane %v108, 2
    %v110 = vadd.f32 %v108, %v109
    %v111 = vrot.slane %v110, 1
    %v112 = vadd.f32 %v110, %v111
    %v115 = vcombine.low %v106, %v112
    %v117 = vunpack.c.l.s4 1966171168
    %v118 = vunpack.c.0.s8 %v117
    %v119 = vlaneseq
    %v120 = vshrl.u32 %v119, 7
    %v121 = vsub.s32 %v118, %v120
    %v122 = vrot.slane %v115, %v121
    %v124 = vunpack.c.l.s4 1966171168
    %v125 = vunpack.c.0.s8 %v124
    %v126 = vlaneseq
    %v127 = vshrl.u32 %v126, 7
    %v128 = vsub.s32 %v125, %v127
    %v129 = vrot.slane %v122, %v128
    %v131 = vlaneseq
    %vm132 = vcmp.ge.s32.totalorder %v131, 0
    %vm133 = vcmp.lt.s32.totalorder %v131, 256
    %vm134 = vmand %vm132, %vm133
    %135 = vst.msk [vmem:[#allocation10] sm:$0x3] %vm134, %v129
    // Predicated region
    $region38: #{tpu_custom_call.1} parent=1 // pred_check
      _
    $region39: #{tpu_custom_call.1} parent=1 // pred_check_branch
      %137 = sbr.rel (0) target = $region41
    $region40: #{tpu_custom_call.1} parent=1 // pred_region
      %s139 = ssub.s32 32, 32
      %140 = vsyncadd [#allocation4], %s139
      %s142 = sshll.u32 [#allocation10], 4
      %s143 = int_to_ptr.vmem [resolvable:$true] %s142
      %145 = dma.vmem_to_hbm [thread:$0]  %s143, 32, %s5, [#allocation4]
    $region41: #{tpu_custom_call.1} parent=1 // pred_fallthru
      _
    // Predicated region
    $region42: #{tpu_custom_call.1} parent=1 // pred_check
      _
    $region43: #{tpu_custom_call.1} parent=1 // pred_check_branch
      %147 = sbr.rel (0) target = $region45
    $region44: #{tpu_custom_call.1} parent=1 // pred_region
      %148 = dma.done [#allocation4], 32
    $region45: #{tpu_custom_call.1} parent=1 // pred_fallthru
      _
    %149 = vsyncpa [#allocation3], 1
    %150 = vsyncpa [#allocation6], 1
    %151 = vsyncpa [#allocation9], 1
    %152 = vsyncpa [#allocation4], 1

</llo_original>
